<compile_context>
chip_gen: v6e
topology: v6e:2x2x1
jax: 0.10.0
libtpu: 0.0.40
codegen_flags: <defaults>
</compile_context>

<pallas_src>
import functools

import jax
import jax.numpy as jnp
from jax import lax
from jax.experimental import pallas as pl
from jax.experimental.pallas import tpu as pltpu


def lstm_tagger_kernel(x_ref, wih_ref, whh_ref, b_ref, wout_ref, bout_ref,
                       out_ref, *, T):
    # x_ref:    (Bblk, Tp)  VMEM  lane-major per-block scalar inputs
    # wih_ref:  (1, 4H)     VMEM  W_ih^T
    # whh_ref:  (H, 4H)     VMEM  W_hh^T
    # b_ref:    (1, 4H)     VMEM  b_ih + b_hh
    # wout_ref: (H, O)      VMEM  hidden2tag.weight^T
    # bout_ref: (1, O)      VMEM  hidden2tag.bias
    # out_ref:  (Bblk, O)   VMEM  log-softmax tag scores for this block
    H = whh_ref.shape[0]
    Bblk = x_ref.shape[0]

    # Hoist all weight reads out of the recurrence (vreg-resident).
    wih = wih_ref[...]      # (1, 4H)
    whh = whh_ref[...]      # (H, 4H)
    bias = b_ref[...]       # (1, 4H)
    wout = wout_ref[...]    # (H, O)
    bout = bout_ref[...]    # (1, O)

    h = jnp.zeros((Bblk, H), jnp.float32)
    c = jnp.zeros((Bblk, H), jnp.float32)

    def cell(h, c, gate_in):
        # Critical path per step: (Bblk,H)@(H,4H) MXU matmul + add.
        gates = jnp.dot(h, whh, preferred_element_type=jnp.float32) + gate_in
        # sigmoid via tanh: one EUP push instead of exp + reciprocal;
        # the extra mul/add co-issue in otherwise idle VALU slots.
        sig = 0.5 * (1.0 + jnp.tanh(0.5 * gates))
        tnh = jnp.tanh(gates)
        i_g = sig[:, 0 * H:1 * H]
        f_g = sig[:, 1 * H:2 * H]
        g_g = tnh[:, 2 * H:3 * H]
        o_g = sig[:, 3 * H:4 * H]
        c_new = f_g * c + i_g * g_g
        h_new = o_g * jnp.tanh(c_new)
        return h_new, c_new

    if T <= 16:
        # Small T: fully unrolled, static lane slices keep x in vregs so the
        # LLO scheduler can interleave MXU / EUP / VPU across timesteps.
        x = x_ref[...]                                   # (Bblk, Tp)
        for t in range(T):
            gate_in = x[:, t:t + 1] * wih + bias         # (Bblk, 4H), VPU-only
            h, c = cell(h, c, gate_in)
    else:
        # Long T: partial unroll caps instruction count / vreg live ranges.
        def body(t, carry):
            h, c = carry
            xt = x_ref[:, pl.ds(t, 1)]                   # (Bblk, 1)
            return cell(h, c, xt * wih + bias)
        h, c = lax.fori_loop(0, T, body, (h, c), unroll=8)

    # hidden2tag + log_softmax(dim=1), one (Bblk, O) store per block.
    tag = jnp.dot(h, wout, preferred_element_type=jnp.float32) + bout
    m = jnp.max(tag, axis=1, keepdims=True)
    shifted = tag - m
    lse = jnp.log(jnp.sum(jnp.exp(shifted), axis=1, keepdims=True))
    out_ref[...] = shifted - lse


def lstm_tagger_forward(inputs, params, *, block_b=8):
    """inputs: (L,) scalar sequence, or (B, L) batch of sequences.

    Matches the PyTorch forward: consumes inputs[..., :L-1] (T = L-1 steps),
    starting from the zero hidden state, and returns log-softmax tag scores.
    Returns (1, O) for a single sequence, (B, O) for a batch.
    """
    single = inputs.ndim == 1
    if single:
        inputs = inputs[None, :]
    B, L = inputs.shape
    T = L - 1                                  # PyTorch loop stops at len-1
    Tp = max(8, ((T + 7) // 8) * 8)            # pad time (lane) axis

    Bblk = block_b
    Bp = ((B + Bblk - 1) // Bblk) * Bblk       # pad batch to block multiple
    nb = Bp // Bblk

    x = inputs[:, :T].astype(jnp.float32)
    x = jnp.pad(x, ((0, Bp - B), (0, Tp - T)))  # (Bp, Tp), lane-major time

    wih_t, whh_t, bias, wout_t, bout = params
    H = whh_t.shape[0]
    O = wout_t.shape[1]

    kernel = functools.partial(lstm_tagger_kernel, T=T)

    out = pl.pallas_call(
        kernel,
        out_shape=jax.ShapeDtypeStruct((Bp, O), jnp.float32),
        grid=(nb,),
        in_specs=[
            # per-block input slab (Bblk sequences in the sublane dim)
            pl.BlockSpec((Bblk, Tp), lambda b: (b, 0)),
            # weights: constant block index -> DMA'd once, stay resident
            pl.BlockSpec((1, 4 * H), lambda b: (0, 0)),
            pl.BlockSpec((H, 4 * H), lambda b: (0, 0)),
            pl.BlockSpec((1, 4 * H), lambda b: (0, 0)),
            pl.BlockSpec((H, O), lambda b: (0, 0)),
            pl.BlockSpec((1, O), lambda b: (0, 0)),
        ],
        out_specs=pl.BlockSpec((Bblk, O), lambda b: (b, 0)),
        compiler_params=pltpu.CompilerParams(
            dimension_semantics=("parallel",)),
    )(x, wih_t, whh_t, bias, wout_t, bout)

    out = out[:B]                              # drop batch padding
    return out if not single else out[0:1]     # (1, O) like PyTorch


def init_params(key, input_dim, hidden_dim, output_dim):
    """Deterministic init mimicking PyTorch's uniform(-1/sqrt(H), 1/sqrt(H))."""
    ks = jax.random.split(key, 7)
    k = 1.0 / jnp.sqrt(hidden_dim)
    w_ih = jax.random.uniform(ks[0], (4 * hidden_dim, input_dim), jnp.float32, -k, k)
    w_hh = jax.random.uniform(ks[1], (4 * hidden_dim, hidden_dim), jnp.float32, -k, k)
    b_ih = jax.random.uniform(ks[2], (4 * hidden_dim,), jnp.float32, -k, k)
    b_hh = jax.random.uniform(ks[3], (4 * hidden_dim,), jnp.float32, -k, k)
    w_out = jax.random.uniform(ks[4], (output_dim, hidden_dim), jnp.float32, -k, k)
    b_out = jax.random.uniform(ks[5], (output_dim,), jnp.float32, -k, k)
    return (
        w_ih.T,                                        # (1, 4H)
        w_hh.T,                                        # (H, 4H)
        (b_ih + b_hh).reshape(1, 4 * hidden_dim),      # (1, 4H)
        w_out.T,                                       # (H, O)
        b_out.reshape(1, output_dim),                  # (1, O)
    )


def reference_forward(inputs, params, hidden_dim):
    """Pure-JAX reference reproducing the PyTorch forward semantics (single seq)."""
    wih_t, whh_t, bias, wout_t, bout = params
    x = inputs[:-1].astype(jnp.float32)
    H = hidden_dim
    h = jnp.zeros((1, H), jnp.float32)
    c = jnp.zeros((1, H), jnp.float32)
    for t in range(x.shape[0]):
        gates = x[t] * wih_t + h @ whh_t + bias
        i_g = jax.nn.sigmoid(gates[:, 0 * H:1 * H])
        f_g = jax.nn.sigmoid(gates[:, 1 * H:2 * H])
        g_g = jnp.tanh(gates[:, 2 * H:3 * H])
        o_g = jax.nn.sigmoid(gates[:, 3 * H:4 * H])
        c = f_g * c + i_g * g_g
        h = o_g * jnp.tanh(c)
    tag = h @ wout_t + bout
    return jax.nn.log_softmax(tag, axis=1)


if __name__ == "__main__":
    input_dim, hidden_dim, output_dim = 1, 32, 8
    seq_len = 8   # PyTorch forward consumes inputs[0..seq_len-2] -> 7 steps

    key = jax.random.PRNGKey(0)
    k_param, k_data = jax.random.split(key)
    params = init_params(k_param, input_dim, hidden_dim, output_dim)

    # Single sequence (exactly the PyTorch module's call pattern).
    single = jax.random.normal(k_data, (seq_len,), jnp.float32)
    out1 = jax.block_until_ready(lstm_tagger_forward(single, params))
    ref1 = reference_forward(single, params, hidden_dim)
    assert out1.shape == (1, output_dim)
    assert jnp.allclose(out1, ref1, atol=1e-4, rtol=1e-4), (out1, ref1)

    # Small batch: one block, all sequences ride in the matmul M dimension.
    batch = 2
    batch_x = jax.random.normal(jax.random.PRNGKey(1), (batch, seq_len), jnp.float32)
    out_b = jax.block_until_ready(lstm_tagger_forward(batch_x, params))
    ref_b = jnp.concatenate(
        [reference_forward(batch_x[b], params, hidden_dim) for b in range(batch)],
        axis=0)
    assert out_b.shape == (batch, output_dim)
    assert jnp.allclose(out_b, ref_b, atol=1e-4, rtol=1e-4), (out_b, ref_b)

    # Larger batch: multiple "parallel" batch blocks (feeds both TCs on v7x).
    big = 12
    big_x = jax.random.normal(jax.random.PRNGKey(2), (big, seq_len), jnp.float32)
    out_big = jax.block_until_ready(lstm_tagger_forward(big_x, params))
    ref_big = jnp.concatenate(
        [reference_forward(big_x[b], params, hidden_dim) for b in range(big)],
        axis=0)
    assert out_big.shape == (big, output_dim)
    assert jnp.allclose(out_big, ref_big, atol=1e-4, rtol=1e-4), (out_big, ref_big)

    print("KERNEL_OK")
</pallas_src>

<mosaic_0001>
module attributes {stable_mosaic.version = 11 : i64} {
  func.func @lstm_tagger_kernel(%arg0: i32, %arg1: memref<8x8xf32, #tpu.memory_space<vmem>>, %arg2: memref<1x128xf32, #tpu.memory_space<vmem>>, %arg3: memref<32x128xf32, #tpu.memory_space<vmem>>, %arg4: memref<1x128xf32, #tpu.memory_space<vmem>>, %arg5: memref<32x8xf32, #tpu.memory_space<vmem>>, %arg6: memref<1x8xf32, #tpu.memory_space<vmem>>, %arg7: memref<8x8xf32, #tpu.memory_space<vmem>>) attributes {dimension_semantics = [#tpu.dimension_semantics<parallel>], iteration_bounds = array<i64: 1>, scalar_prefetch = 0 : i64, scratch_operands = 0 : i64, tpu.core_type = #tpu.core_type<tc>, window_params = [{transform_indices = @transform_0, window_bounds = array<i64: 8, 8>}, {pipeline_mode = #tpu.pipeline_mode<synchronous>, transform_indices = @transform_1, window_bounds = array<i64: 1, 128>}, {pipeline_mode = #tpu.pipeline_mode<synchronous>, transform_indices = @transform_2, window_bounds = array<i64: 32, 128>}, {pipeline_mode = #tpu.pipeline_mode<synchronous>, transform_indices = @transform_3, window_bounds = array<i64: 1, 128>}, {pipeline_mode = #tpu.pipeline_mode<synchronous>, transform_indices = @transform_4, window_bounds = array<i64: 32, 8>}, {pipeline_mode = #tpu.pipeline_mode<synchronous>, transform_indices = @transform_5, window_bounds = array<i64: 1, 8>}, {transform_indices = @transform_6, window_bounds = array<i64: 8, 8>}]} {
    %c0 = arith.constant 0 : index
    %c0_0 = arith.constant 0 : index
    %0 = vector.load %arg2[%c0, %c0_0] : memref<1x128xf32, #tpu.memory_space<vmem>>, vector<1x128xf32>
    %c0_1 = arith.constant 0 : index
    %c0_2 = arith.constant 0 : index
    %1 = vector.load %arg3[%c0_1, %c0_2] : memref<32x128xf32, #tpu.memory_space<vmem>>, vector<32x128xf32>
    %c0_3 = arith.constant 0 : index
    %c0_4 = arith.constant 0 : index
    %2 = vector.load %arg4[%c0_3, %c0_4] : memref<1x128xf32, #tpu.memory_space<vmem>>, vector<1x128xf32>
    %c0_5 = arith.constant 0 : index
    %c0_6 = arith.constant 0 : index
    %3 = vector.load %arg5[%c0_5, %c0_6] : memref<32x8xf32, #tpu.memory_space<vmem>>, vector<32x8xf32>
    %c0_7 = arith.constant 0 : index
    %c0_8 = arith.constant 0 : index
    %4 = vector.load %arg6[%c0_7, %c0_8] : memref<1x8xf32, #tpu.memory_space<vmem>>, vector<1x8xf32>
    %cst = arith.constant 0.000000e+00 : f32
    %5 = vector.broadcast %cst : f32 to vector<8x32xf32>
    %cst_9 = arith.constant 0.000000e+00 : f32
    %6 = vector.broadcast %cst_9 : f32 to vector<8x32xf32>
    %c0_10 = arith.constant 0 : index
    %c0_11 = arith.constant 0 : index
    %7 = vector.load %arg1[%c0_10, %c0_11] : memref<8x8xf32, #tpu.memory_space<vmem>>, vector<8x8xf32>
    %8 = vector.extract_strided_slice %7 {offsets = [0, 0], sizes = [8, 1], strides = [1, 1]} : vector<8x8xf32> to vector<8x1xf32>
    %9 = vector.broadcast %8 : vector<8x1xf32> to vector<8x128xf32>
    %10 = vector.broadcast %0 : vector<1x128xf32> to vector<8x128xf32>
    %11 = arith.mulf %9, %10 : vector<8x128xf32>
    %12 = vector.broadcast %2 : vector<1x128xf32> to vector<8x128xf32>
    %13 = arith.addf %11, %12 : vector<8x128xf32>
    %cst_12 = arith.constant dense<0.000000e+00> : vector<8x128xf32>
    %14 = tpu.matmul %5, %1, %cst_12 {dimension_numbers = #tpu.dot_dimension_numbers<[1], [0], [0], [1], [0, 0, 1, 1], [], []>} : vector<8x32xf32>, vector<32x128xf32>, vector<8x128xf32> -> vector<8x128xf32>
    %15 = arith.addf %14, %13 : vector<8x128xf32>
    %cst_13 = arith.constant 5.000000e-01 : f32
    %16 = vector.broadcast %cst_13 : f32 to vector<8x128xf32>
    %17 = arith.mulf %16, %15 : vector<8x128xf32>
    %18 = math.tanh %17 : vector<8x128xf32>
    %cst_14 = arith.constant 1.000000e+00 : f32
    %19 = vector.broadcast %cst_14 : f32 to vector<8x128xf32>
    %20 = arith.addf %19, %18 : vector<8x128xf32>
    %cst_15 = arith.constant 5.000000e-01 : f32
    %21 = vector.broadcast %cst_15 : f32 to vector<8x128xf32>
    %22 = arith.mulf %21, %20 : vector<8x128xf32>
    %23 = math.tanh %15 : vector<8x128xf32>
    %24 = vector.extract_strided_slice %22 {offsets = [0, 0], sizes = [8, 32], strides = [1, 1]} : vector<8x128xf32> to vector<8x32xf32>
    %25 = vector.extract_strided_slice %22 {offsets = [0, 32], sizes = [8, 32], strides = [1, 1]} : vector<8x128xf32> to vector<8x32xf32>
    %26 = vector.extract_strided_slice %23 {offsets = [0, 64], sizes = [8, 32], strides = [1, 1]} : vector<8x128xf32> to vector<8x32xf32>
    %27 = vector.extract_strided_slice %22 {offsets = [0, 96], sizes = [8, 32], strides = [1, 1]} : vector<8x128xf32> to vector<8x32xf32>
    %28 = arith.mulf %25, %6 : vector<8x32xf32>
    %29 = arith.mulf %24, %26 : vector<8x32xf32>
    %30 = arith.addf %28, %29 : vector<8x32xf32>
    %31 = math.tanh %30 : vector<8x32xf32>
    %32 = arith.mulf %27, %31 : vector<8x32xf32>
    %33 = vector.extract_strided_slice %7 {offsets = [0, 1], sizes = [8, 1], strides = [1, 1]} : vector<8x8xf32> to vector<8x1xf32>
    %34 = vector.broadcast %33 : vector<8x1xf32> to vector<8x128xf32>
    %35 = vector.broadcast %0 : vector<1x128xf32> to vector<8x128xf32>
    %36 = arith.mulf %34, %35 : vector<8x128xf32>
    %37 = vector.broadcast %2 : vector<1x128xf32> to vector<8x128xf32>
    %38 = arith.addf %36, %37 : vector<8x128xf32>
    %cst_16 = arith.constant dense<0.000000e+00> : vector<8x128xf32>
    %39 = tpu.matmul %32, %1, %cst_16 {dimension_numbers = #tpu.dot_dimension_numbers<[1], [0], [0], [1], [0, 0, 1, 1], [], []>} : vector<8x32xf32>, vector<32x128xf32>, vector<8x128xf32> -> vector<8x128xf32>
    %40 = arith.addf %39, %38 : vector<8x128xf32>
    %cst_17 = arith.constant 5.000000e-01 : f32
    %41 = vector.broadcast %cst_17 : f32 to vector<8x128xf32>
    %42 = arith.mulf %41, %40 : vector<8x128xf32>
    %43 = math.tanh %42 : vector<8x128xf32>
    %cst_18 = arith.constant 1.000000e+00 : f32
    %44 = vector.broadcast %cst_18 : f32 to vector<8x128xf32>
    %45 = arith.addf %44, %43 : vector<8x128xf32>
    %cst_19 = arith.constant 5.000000e-01 : f32
    %46 = vector.broadcast %cst_19 : f32 to vector<8x128xf32>
    %47 = arith.mulf %46, %45 : vector<8x128xf32>
    %48 = math.tanh %40 : vector<8x128xf32>
    %49 = vector.extract_strided_slice %47 {offsets = [0, 0], sizes = [8, 32], strides = [1, 1]} : vector<8x128xf32> to vector<8x32xf32>
    %50 = vector.extract_strided_slice %47 {offsets = [0, 32], sizes = [8, 32], strides = [1, 1]} : vector<8x128xf32> to vector<8x32xf32>
    %51 = vector.extract_strided_slice %48 {offsets = [0, 64], sizes = [8, 32], strides = [1, 1]} : vector<8x128xf32> to vector<8x32xf32>
    %52 = vector.extract_strided_slice %47 {offsets = [0, 96], sizes = [8, 32], strides = [1, 1]} : vector<8x128xf32> to vector<8x32xf32>
    %53 = arith.mulf %50, %30 : vector<8x32xf32>
    %54 = arith.mulf %49, %51 : vector<8x32xf32>
    %55 = arith.addf %53, %54 : vector<8x32xf32>
    %56 = math.tanh %55 : vector<8x32xf32>
    %57 = arith.mulf %52, %56 : vector<8x32xf32>
    %58 = vector.extract_strided_slice %7 {offsets = [0, 2], sizes = [8, 1], strides = [1, 1]} : vector<8x8xf32> to vector<8x1xf32>
    %59 = vector.broadcast %58 : vector<8x1xf32> to vector<8x128xf32>
    %60 = vector.broadcast %0 : vector<1x128xf32> to vector<8x128xf32>
    %61 = arith.mulf %59, %60 : vector<8x128xf32>
    %62 = vector.broadcast %2 : vector<1x128xf32> to vector<8x128xf32>
    %63 = arith.addf %61, %62 : vector<8x128xf32>
    %cst_20 = arith.constant dense<0.000000e+00> : vector<8x128xf32>
    %64 = tpu.matmul %57, %1, %cst_20 {dimension_numbers = #tpu.dot_dimension_numbers<[1], [0], [0], [1], [0, 0, 1, 1], [], []>} : vector<8x32xf32>, vector<32x128xf32>, vector<8x128xf32> -> vector<8x128xf32>
    %65 = arith.addf %64, %63 : vector<8x128xf32>
    %cst_21 = arith.constant 5.000000e-01 : f32
    %66 = vector.broadcast %cst_21 : f32 to vector<8x128xf32>
    %67 = arith.mulf %66, %65 : vector<8x128xf32>
    %68 = math.tanh %67 : vector<8x128xf32>
    %cst_22 = arith.constant 1.000000e+00 : f32
    %69 = vector.broadcast %cst_22 : f32 to vector<8x128xf32>
    %70 = arith.addf %69, %68 : vector<8x128xf32>
    %cst_23 = arith.constant 5.000000e-01 : f32
    %71 = vector.broadcast %cst_23 : f32 to vector<8x128xf32>
    %72 = arith.mulf %71, %70 : vector<8x128xf32>
    %73 = math.tanh %65 : vector<8x128xf32>
    %74 = vector.extract_strided_slice %72 {offsets = [0, 0], sizes = [8, 32], strides = [1, 1]} : vector<8x128xf32> to vector<8x32xf32>
    %75 = vector.extract_strided_slice %72 {offsets = [0, 32], sizes = [8, 32], strides = [1, 1]} : vector<8x128xf32> to vector<8x32xf32>
    %76 = vector.extract_strided_slice %73 {offsets = [0, 64], sizes = [8, 32], strides = [1, 1]} : vector<8x128xf32> to vector<8x32xf32>
    %77 = vector.extract_strided_slice %72 {offsets = [0, 96], sizes = [8, 32], strides = [1, 1]} : vector<8x128xf32> to vector<8x32xf32>
    %78 = arith.mulf %75, %55 : vector<8x32xf32>
    %79 = arith.mulf %74, %76 : vector<8x32xf32>
    %80 = arith.addf %78, %79 : vector<8x32xf32>
    %81 = math.tanh %80 : vector<8x32xf32>
    %82 = arith.mulf %77, %81 : vector<8x32xf32>
    %83 = vector.extract_strided_slice %7 {offsets = [0, 3], sizes = [8, 1], strides = [1, 1]} : vector<8x8xf32> to vector<8x1xf32>
    %84 = vector.broadcast %83 : vector<8x1xf32> to vector<8x128xf32>
    %85 = vector.broadcast %0 : vector<1x128xf32> to vector<8x128xf32>
    %86 = arith.mulf %84, %85 : vector<8x128xf32>
    %87 = vector.broadcast %2 : vector<1x128xf32> to vector<8x128xf32>
    %88 = arith.addf %86, %87 : vector<8x128xf32>
    %cst_24 = arith.constant dense<0.000000e+00> : vector<8x128xf32>
    %89 = tpu.matmul %82, %1, %cst_24 {dimension_numbers = #tpu.dot_dimension_numbers<[1], [0], [0], [1], [0, 0, 1, 1], [], []>} : vector<8x32xf32>, vector<32x128xf32>, vector<8x128xf32> -> vector<8x128xf32>
    %90 = arith.addf %89, %88 : vector<8x128xf32>
    %cst_25 = arith.constant 5.000000e-01 : f32
    %91 = vector.broadcast %cst_25 : f32 to vector<8x128xf32>
    %92 = arith.mulf %91, %90 : vector<8x128xf32>
    %93 = math.tanh %92 : vector<8x128xf32>
    %cst_26 = arith.constant 1.000000e+00 : f32
    %94 = vector.broadcast %cst_26 : f32 to vector<8x128xf32>
    %95 = arith.addf %94, %93 : vector<8x128xf32>
    %cst_27 = arith.constant 5.000000e-01 : f32
    %96 = vector.broadcast %cst_27 : f32 to vector<8x128xf32>
    %97 = arith.mulf %96, %95 : vector<8x128xf32>
    %98 = math.tanh %90 : vector<8x128xf32>
    %99 = vector.extract_strided_slice %97 {offsets = [0, 0], sizes = [8, 32], strides = [1, 1]} : vector<8x128xf32> to vector<8x32xf32>
    %100 = vector.extract_strided_slice %97 {offsets = [0, 32], sizes = [8, 32], strides = [1, 1]} : vector<8x128xf32> to vector<8x32xf32>
    %101 = vector.extract_strided_slice %98 {offsets = [0, 64], sizes = [8, 32], strides = [1, 1]} : vector<8x128xf32> to vector<8x32xf32>
    %102 = vector.extract_strided_slice %97 {offsets = [0, 96], sizes = [8, 32], strides = [1, 1]} : vector<8x128xf32> to vector<8x32xf32>
    %103 = arith.mulf %100, %80 : vector<8x32xf32>
    %104 = arith.mulf %99, %101 : vector<8x32xf32>
    %105 = arith.addf %103, %104 : vector<8x32xf32>
    %106 = math.tanh %105 : vector<8x32xf32>
    %107 = arith.mulf %102, %106 : vector<8x32xf32>
    %108 = vector.extract_strided_slice %7 {offsets = [0, 4], sizes = [8, 1], strides = [1, 1]} : vector<8x8xf32> to vector<8x1xf32>
    %109 = vector.broadcast %108 : vector<8x1xf32> to vector<8x128xf32>
    %110 = vector.broadcast %0 : vector<1x128xf32> to vector<8x128xf32>
    %111 = arith.mulf %109, %110 : vector<8x128xf32>
    %112 = vector.broadcast %2 : vector<1x128xf32> to vector<8x128xf32>
    %113 = arith.addf %111, %112 : vector<8x128xf32>
    %cst_28 = arith.constant dense<0.000000e+00> : vector<8x128xf32>
    %114 = tpu.matmul %107, %1, %cst_28 {dimension_numbers = #tpu.dot_dimension_numbers<[1], [0], [0], [1], [0, 0, 1, 1], [], []>} : vector<8x32xf32>, vector<32x128xf32>, vector<8x128xf32> -> vector<8x128xf32>
    %115 = arith.addf %114, %113 : vector<8x128xf32>
    %cst_29 = arith.constant 5.000000e-01 : f32
    %116 = vector.broadcast %cst_29 : f32 to vector<8x128xf32>
    %117 = arith.mulf %116, %115 : vector<8x128xf32>
    %118 = math.tanh %117 : vector<8x128xf32>
    %cst_30 = arith.constant 1.000000e+00 : f32
    %119 = vector.broadcast %cst_30 : f32 to vector<8x128xf32>
    %120 = arith.addf %119, %118 : vector<8x128xf32>
    %cst_31 = arith.constant 5.000000e-01 : f32
    %121 = vector.broadcast %cst_31 : f32 to vector<8x128xf32>
    %122 = arith.mulf %121, %120 : vector<8x128xf32>
    %123 = math.tanh %115 : vector<8x128xf32>
    %124 = vector.extract_strided_slice %122 {offsets = [0, 0], sizes = [8, 32], strides = [1, 1]} : vector<8x128xf32> to vector<8x32xf32>
    %125 = vector.extract_strided_slice %122 {offsets = [0, 32], sizes = [8, 32], strides = [1, 1]} : vector<8x128xf32> to vector<8x32xf32>
    %126 = vector.extract_strided_slice %123 {offsets = [0, 64], sizes = [8, 32], strides = [1, 1]} : vector<8x128xf32> to vector<8x32xf32>
    %127 = vector.extract_strided_slice %122 {offsets = [0, 96], sizes = [8, 32], strides = [1, 1]} : vector<8x128xf32> to vector<8x32xf32>
    %128 = arith.mulf %125, %105 : vector<8x32xf32>
    %129 = arith.mulf %124, %126 : vector<8x32xf32>
    %130 = arith.addf %128, %129 : vector<8x32xf32>
    %131 = math.tanh %130 : vector<8x32xf32>
    %132 = arith.mulf %127, %131 : vector<8x32xf32>
    %133 = vector.extract_strided_slice %7 {offsets = [0, 5], sizes = [8, 1], strides = [1, 1]} : vector<8x8xf32> to vector<8x1xf32>
    %134 = vector.broadcast %133 : vector<8x1xf32> to vector<8x128xf32>
    %135 = vector.broadcast %0 : vector<1x128xf32> to vector<8x128xf32>
    %136 = arith.mulf %134, %135 : vector<8x128xf32>
    %137 = vector.broadcast %2 : vector<1x128xf32> to vector<8x128xf32>
    %138 = arith.addf %136, %137 : vector<8x128xf32>
    %cst_32 = arith.constant dense<0.000000e+00> : vector<8x128xf32>
    %139 = tpu.matmul %132, %1, %cst_32 {dimension_numbers = #tpu.dot_dimension_numbers<[1], [0], [0], [1], [0, 0, 1, 1], [], []>} : vector<8x32xf32>, vector<32x128xf32>, vector<8x128xf32> -> vector<8x128xf32>
    %140 = arith.addf %139, %138 : vector<8x128xf32>
    %cst_33 = arith.constant 5.000000e-01 : f32
    %141 = vector.broadcast %cst_33 : f32 to vector<8x128xf32>
    %142 = arith.mulf %141, %140 : vector<8x128xf32>
    %143 = math.tanh %142 : vector<8x128xf32>
    %cst_34 = arith.constant 1.000000e+00 : f32
    %144 = vector.broadcast %cst_34 : f32 to vector<8x128xf32>
    %145 = arith.addf %144, %143 : vector<8x128xf32>
    %cst_35 = arith.constant 5.000000e-01 : f32
    %146 = vector.broadcast %cst_35 : f32 to vector<8x128xf32>
    %147 = arith.mulf %146, %145 : vector<8x128xf32>
    %148 = math.tanh %140 : vector<8x128xf32>
    %149 = vector.extract_strided_slice %147 {offsets = [0, 0], sizes = [8, 32], strides = [1, 1]} : vector<8x128xf32> to vector<8x32xf32>
    %150 = vector.extract_strided_slice %147 {offsets = [0, 32], sizes = [8, 32], strides = [1, 1]} : vector<8x128xf32> to vector<8x32xf32>
    %151 = vector.extract_strided_slice %148 {offsets = [0, 64], sizes = [8, 32], strides = [1, 1]} : vector<8x128xf32> to vector<8x32xf32>
    %152 = vector.extract_strided_slice %147 {offsets = [0, 96], sizes = [8, 32], strides = [1, 1]} : vector<8x128xf32> to vector<8x32xf32>
    %153 = arith.mulf %150, %130 : vector<8x32xf32>
    %154 = arith.mulf %149, %151 : vector<8x32xf32>
    %155 = arith.addf %153, %154 : vector<8x32xf32>
    %156 = math.tanh %155 : vector<8x32xf32>
    %157 = arith.mulf %152, %156 : vector<8x32xf32>
    %158 = vector.extract_strided_slice %7 {offsets = [0, 6], sizes = [8, 1], strides = [1, 1]} : vector<8x8xf32> to vector<8x1xf32>
    %159 = vector.broadcast %158 : vector<8x1xf32> to vector<8x128xf32>
    %160 = vector.broadcast %0 : vector<1x128xf32> to vector<8x128xf32>
    %161 = arith.mulf %159, %160 : vector<8x128xf32>
    %162 = vector.broadcast %2 : vector<1x128xf32> to vector<8x128xf32>
    %163 = arith.addf %161, %162 : vector<8x128xf32>
    %cst_36 = arith.constant dense<0.000000e+00> : vector<8x128xf32>
    %164 = tpu.matmul %157, %1, %cst_36 {dimension_numbers = #tpu.dot_dimension_numbers<[1], [0], [0], [1], [0, 0, 1, 1], [], []>} : vector<8x32xf32>, vector<32x128xf32>, vector<8x128xf32> -> vector<8x128xf32>
    %165 = arith.addf %164, %163 : vector<8x128xf32>
    %cst_37 = arith.constant 5.000000e-01 : f32
    %166 = vector.broadcast %cst_37 : f32 to vector<8x128xf32>
    %167 = arith.mulf %166, %165 : vector<8x128xf32>
    %168 = math.tanh %167 : vector<8x128xf32>
    %cst_38 = arith.constant 1.000000e+00 : f32
    %169 = vector.broadcast %cst_38 : f32 to vector<8x128xf32>
    %170 = arith.addf %169, %168 : vector<8x128xf32>
    %cst_39 = arith.constant 5.000000e-01 : f32
    %171 = vector.broadcast %cst_39 : f32 to vector<8x128xf32>
    %172 = arith.mulf %171, %170 : vector<8x128xf32>
    %173 = math.tanh %165 : vector<8x128xf32>
    %174 = vector.extract_strided_slice %172 {offsets = [0, 0], sizes = [8, 32], strides = [1, 1]} : vector<8x128xf32> to vector<8x32xf32>
    %175 = vector.extract_strided_slice %172 {offsets = [0, 32], sizes = [8, 32], strides = [1, 1]} : vector<8x128xf32> to vector<8x32xf32>
    %176 = vector.extract_strided_slice %173 {offsets = [0, 64], sizes = [8, 32], strides = [1, 1]} : vector<8x128xf32> to vector<8x32xf32>
    %177 = vector.extract_strided_slice %172 {offsets = [0, 96], sizes = [8, 32], strides = [1, 1]} : vector<8x128xf32> to vector<8x32xf32>
    %178 = arith.mulf %175, %155 : vector<8x32xf32>
    %179 = arith.mulf %174, %176 : vector<8x32xf32>
    %180 = arith.addf %178, %179 : vector<8x32xf32>
    %181 = math.tanh %180 : vector<8x32xf32>
    %182 = arith.mulf %177, %181 : vector<8x32xf32>
    %cst_40 = arith.constant dense<0.000000e+00> : vector<8x8xf32>
    %183 = tpu.matmul %182, %3, %cst_40 {dimension_numbers = #tpu.dot_dimension_numbers<[1], [0], [0], [1], [0, 0, 1, 1], [], []>} : vector<8x32xf32>, vector<32x8xf32>, vector<8x8xf32> -> vector<8x8xf32>
    %184 = vector.broadcast %4 : vector<1x8xf32> to vector<8x8xf32>
    %185 = arith.addf %183, %184 : vector<8x8xf32>
    %cst_41 = arith.constant dense<0xFF800000> : vector<8xf32>
    %186 = vector.multi_reduction <maximumf>, %185, %cst_41 [1] : vector<8x8xf32> to vector<8xf32>
    %187 = vector.shape_cast %186 : vector<8xf32> to vector<8x1xf32>
    %188 = vector.broadcast %187 : vector<8x1xf32> to vector<8x8xf32>
    %189 = arith.subf %185, %188 : vector<8x8xf32>
    %190 = math.exp %189 : vector<8x8xf32>
    %cst_42 = arith.constant dense<0.000000e+00> : vector<8xf32>
    %191 = vector.multi_reduction <add>, %190, %cst_42 [1] : vector<8x8xf32> to vector<8xf32>
    %192 = vector.shape_cast %191 : vector<8xf32> to vector<8x1xf32>
    %193 = math.log %192 : vector<8x1xf32>
    %194 = vector.broadcast %193 : vector<8x1xf32> to vector<8x8xf32>
    %195 = arith.subf %189, %194 : vector<8x8xf32>
    %c0_43 = arith.constant 0 : index
    %c0_44 = arith.constant 0 : index
    %196 = vector.load %arg7[%c0_43, %c0_44] : memref<8x8xf32, #tpu.memory_space<vmem>>, vector<8x8xf32>
    tpu.vector_store %arg7[%c0_43, %c0_44], %195 {strides = array<i32>} : memref<8x8xf32, #tpu.memory_space<vmem>>, vector<8x8xf32>,
    return
  }
  func.func @transform_0(%arg0: i32) -> (i32, i32) {
    %c0_i32 = arith.constant 0 : i32
    %c0_i32_0 = arith.constant 0 : i32
    return %arg0, %c0_i32 : i32, i32
  }
  func.func @transform_1(%arg0: i32) -> (i32, i32) {
    %c0_i32 = arith.constant 0 : i32
    %c0_i32_0 = arith.constant 0 : i32
    %c0_i32_1 = arith.constant 0 : i32
    return %c0_i32, %c0_i32_0 : i32, i32
  }
  func.func @transform_2(%arg0: i32) -> (i32, i32) {
    %c0_i32 = arith.constant 0 : i32
    %c0_i32_0 = arith.constant 0 : i32
    %c0_i32_1 = arith.constant 0 : i32
    return %c0_i32, %c0_i32_0 : i32, i32
  }
  func.func @transform_3(%arg0: i32) -> (i32, i32) {
    %c0_i32 = arith.constant 0 : i32
    %c0_i32_0 = arith.constant 0 : i32
    %c0_i32_1 = arith.constant 0 : i32
    return %c0_i32, %c0_i32_0 : i32, i32
  }
  func.func @transform_4(%arg0: i32) -> (i32, i32) {
    %c0_i32 = arith.constant 0 : i32
    %c0_i32_0 = arith.constant 0 : i32
    %c0_i32_1 = arith.constant 0 : i32
    return %c0_i32, %c0_i32_0 : i32, i32
  }
  func.func @transform_5(%arg0: i32) -> (i32, i32) {
    %c0_i32 = arith.constant 0 : i32
    %c0_i32_0 = arith.constant 0 : i32
    %c0_i32_1 = arith.constant 0 : i32
    return %c0_i32, %c0_i32_0 : i32, i32
  }
  func.func @transform_6(%arg0: i32) -> (i32, i32) {
    %c0_i32 = arith.constant 0 : i32
    %c0_i32_0 = arith.constant 0 : i32
    return %arg0, %c0_i32 : i32, i32
  }
}

</mosaic_0001>

<llo_original>
// kernel: tpu_custom_call.1
$region0: #{tpu_custom_call.1}
  #allocation0 [shape = 'u32[]', space=smem, size = 0x4, offset = 0x4, fixed_abs, tag = 'smem constant byte address 0x4 - core index']
  #allocation1 [shape = 'u32[144,128]{1,0:T(1,128)}', space=vmem, size = 0x12000, scoped, tag = 'internal scratch']
  %s0 = inlined_call_operand.vmem [shape: f32[8,8], index: 0, kind: input, shape index: {}]
  %s1 = inlined_call_operand.vmem [shape: f32[1,128], index: 1, kind: input, shape index: {}]
  %s2 = inlined_call_operand.vmem [shape: f32[32,128], index: 2, kind: input, shape index: {}]
  %s3 = inlined_call_operand.vmem [shape: f32[1,128], index: 3, kind: input, shape index: {}]
  %s4 = inlined_call_operand.vmem [shape: f32[32,8], index: 4, kind: input, shape index: {}]
  %s5 = inlined_call_operand.vmem [shape: f32[1,8], index: 5, kind: input, shape index: {}]
  %s6 = inlined_call_operand.hbm [shape: f32[8,8], index: 6, kind: output, shape index: {}]
  %s7 = sld [smem:[#allocation0]]
  $region34: #{tpu_custom_call.1} parent=0
    _
  %s9 = ssub.s32 1, %s7
  %s10 = scalar_select 0, %s9, %s7
  $region1: #{tpu_custom_call.1} parent=0
    #allocation2 [shape = 'u8[4096]{0}', space=vmem, size = 0x1000, scoped, tag = 'output window, operand 0, single buffered']
    #allocation3 [shape = 's32[1]{0}', space=sflag, size = 0x4, scoped, tag = 'scoped memory for tpu_custom_call.1']
    %11 = vsyncpa [#allocation3], 0
    // Predicated region
    $region2: #{tpu_custom_call.1} parent=1 // pred_check
      _
    $region3: #{tpu_custom_call.1} parent=1 // pred_check_branch
      %13 = sbr.rel (0) target = $region5
    $region4: #{tpu_custom_call.1} parent=1 // pred_region
      _
    $region5: #{tpu_custom_call.1} parent=1 // pred_fallthru
      _
    // Predicated region
    $region6: #{tpu_custom_call.1} parent=1 // pred_check
      _
    $region7: #{tpu_custom_call.1} parent=1 // pred_check_branch
      %15 = sbr.rel (0) target = $region9
    $region8: #{tpu_custom_call.1} parent=1 // pred_region
      _
    $region9: #{tpu_custom_call.1} parent=1 // pred_fallthru
      _
    // Predicated region
    $region10: #{tpu_custom_call.1} parent=1 // pred_check
      _
    $region11: #{tpu_custom_call.1} parent=1 // pred_check_branch
      %17 = sbr.rel (0) target = $region13
    $region12: #{tpu_custom_call.1} parent=1 // pred_region
      _
    $region13: #{tpu_custom_call.1} parent=1 // pred_fallthru
      _
    // Predicated region
    $region14: #{tpu_custom_call.1} parent=1 // pred_check
      _
    $region15: #{tpu_custom_call.1} parent=1 // pred_check_branch
      %19 = sbr.rel (0) target = $region17
    $region16: #{tpu_custom_call.1} parent=1 // pred_region
      _
    $region17: #{tpu_custom_call.1} parent=1 // pred_fallthru
      _
    // Predicated region
    $region18: #{tpu_custom_call.1} parent=1 // pred_check
      _
    $region19: #{tpu_custom_call.1} parent=1 // pred_check_branch
      %21 = sbr.rel (0) target = $region21
    $region20: #{tpu_custom_call.1} parent=1 // pred_region
      _
    $region21: #{tpu_custom_call.1} parent=1 // pred_fallthru
      _
    // Predicated region
    $region22: #{tpu_custom_call.1} parent=1 // pred_check
      _
    $region23: #{tpu_custom_call.1} parent=1 // pred_check_branch
      %23 = sbr.rel (0) target = $region25
    $region24: #{tpu_custom_call.1} parent=1 // pred_region
      _
    $region25: #{tpu_custom_call.1} parent=1 // pred_fallthru
      _
    %v24 = vld [vmem:[%s1] sm:$0x1]
    %v25 = vld [vmem:[%s2] sm:$0xff]
    %v26 = vld [vmem:[%s2 + $0x8] sm:$0xff]
    %v27 = vld [vmem:[%s2 + $0x10] sm:$0xff]
    %v28 = vld [vmem:[%s2 + $0x18] sm:$0xff]
    %v29 = vld [vmem:[%s3] sm:$0x1]
    %v30 = vld [vmem:[%s4] sm:$0xff]
    %v31 = vld [vmem:[%s4 + $0x8] sm:$0xff]
    %v32 = vld [vmem:[%s4 + $0x10] sm:$0xff]
    %v33 = vld [vmem:[%s4 + $0x18] sm:$0xff]
    %v34 = vld [vmem:[%s5] sm:$0x1]
    %v35 = vld [vmem:[%s0] sm:$0xff]
    %37 = vset.pattern.permute.xlu0 0
    %38 = vperm.xlu0 %37, %v35
    %v39 = vpop.permute.xlu0 %38
    %v42 = vlaneseq
    %v43 = vshrl.u32 %v42, 7
    %v44 = vsub.s32 0, %v43
    %v45 = vrot.slane %v24, %v44
    %v47 = vmul.f32 %v39, %v45
    %v49 = vlaneseq
    %v50 = vshrl.u32 %v49, 7
    %v51 = vsub.s32 0, %v50
    %v52 = vrot.slane %v29, %v51
    %v54 = vadd.f32 %v47, %v52
    %vm55 = vcmask 261120
    %v57 = vsel %vm55, 0.0, 0
    %59 = vmatprep.subr.mxu0 0.0
    %60 = vmatpush1.msra.mxu0 0.0
    %61 = vmatprep.subr.mxu0 0.0
    %62 = vmatpush1.msra.mxu0 0.0
    %63 = vmatprep.subr.mxu0 0.0
    %64 = vmatpush1.msra.mxu0 0.0
    %65 = vmatprep.subr.mxu0 0.0
    %66 = vmatpush1.msra.mxu0 0.0
    %67 = vmatprep.subr.mxu0 0.0
    %68 = vmatpush1.msra.mxu0 0.0
    %69 = vmatprep.subr.mxu0 0.0
    %70 = vmatpush1.msra.mxu0 0.0
    %71 = vmatprep.subr.mxu0 0.0
    %72 = vmatpush1.msra.mxu0 0.0
    %73 = vmatprep.subr.mxu0 0.0
    %74 = vmatpush1.msra.mxu0 0.0
    %75 = vmatprep.subr.mxu0 0.0
    %76 = vmatpush1.msra.mxu0 0.0
    %77 = vmatprep.subr.mxu0 0.0
    %78 = vmatpush1.msra.mxu0 0.0
    %79 = vmatprep.subr.mxu0 0.0
    %80 = vmatpush1.msra.mxu0 0.0
    %81 = vmatprep.subr.mxu0 0.0
    %82 = vmatpush1.msra.mxu0 0.0
    %83 = vmatprep.subr.mxu0 0.0
    %84 = vmatpush1.msra.mxu0 %v28
    %85 = vmatprep.subr.mxu0 0.0
    %86 = vmatpush1.msra.mxu0 %v27
    %87 = vmatprep.subr.mxu0 0.0
    %88 = vmatpush1.msra.mxu0 %v26
    %89 = vmatprep.subr.mxu0 0.0
    %90 = vmatpush1.msra.mxu0 %v25
    %91 = vmatprep.subr.mxu0 0.0
    %92 = vmatpush2.msra.mxu0 0.0
    %93 = vmatprep.subr.mxu0 0.0
    %94 = vmatpush2.msra.mxu0 0.0
    %95 = vmatprep.subr.mxu0 0.0
    %96 = vmatpush2.msra.mxu0 0.0
    %97 = vmatprep.subr.mxu0 0.0
    %98 = vmatpush2.msra.mxu0 0.0
    %99 = vmatprep.subr.mxu0 0.0
    %100 = vmatpush2.msra.mxu0 0.0
    %101 = vmatprep.subr.mxu0 0.0
    %102 = vmatpush2.msra.mxu0 0.0
    %103 = vmatprep.subr.mxu0 0.0
    %104 = vmatpush2.msra.mxu0 0.0
    %105 = vmatprep.subr.mxu0 0.0
    %106 = vmatpush2.msra.mxu0 0.0
    %107 = vmatprep.subr.mxu0 0.0
    %108 = vmatpush2.msra.mxu0 0.0
    %109 = vmatprep.subr.mxu0 0.0
    %110 = vmatpush2.msra.mxu0 0.0
    %111 = vmatprep.subr.mxu0 0.0
    %112 = vmatpush2.msra.mxu0 0.0
    %113 = vmatprep.subr.mxu0 0.0
    %114 = vmatpush2.msra.mxu0 0.0
    %115 = vmatprep.subr.mxu0 0.0
    %116 = vmatpush2.msra.mxu0 0.0
    %117 = vmatprep.subr.mxu0 0.0
    %118 = vmatpush2.msra.mxu0 0.0
    %119 = vmatprep.subr.mxu0 0.0
    %120 = vmatpush2.msra.mxu0 0.0
    %121 = vmatprep.subr.mxu0 0.0
    %122 = vmatpush2.msra.mxu0 0.0
    %123 = vmatprep.mubr.f32.mxu0 0.0
    %124 = vmatmul.mubr.f32.gmra.mxu0 %v57
    %v125 = vpop.f32.mrf.mxu0
    %v126 = vadd.f32 %v54, %v125
    %v127 = vpop.f32.mrf.mxu0
    %128 = vdwg.mxu0
    %v129 = vmul.f32 %v126, 0.5
    %v130 = vtanh.pop %v129
    %v131 = vadd.f32 %v130, 1.0
    %v132 = vmul.f32 %v131, 0.5
    %v133 = vtanh.pop %v126
    %v134 = vmul.f32 %v132, 0.0
    %136 = vrot.lane.b32.xlu0 %v133, 64
    %v137 = vpop.permute.xlu0 %136
    %v139 = vmul.f32 %v132, %v137
    %141 = vrot.lane.b32.xlu0 %v139, 32
    %v142 = vpop.permute.xlu0 %141
    %v144 = vadd.f32 %v134, %v142
    %v145 = vtanh.pop %v144
    %147 = vrot.lane.b32.xlu0 %v145, 64
    %v148 = vpop.permute.xlu0 %147
    %v150 = vmul.f32 %v132, %v148
    %151 = vset.pattern.permute.xlu0 1
    %152 = vperm.xlu0 %151, %v35
    %v153 = vpop.permute.xlu0 %152
    %v155 = vmul.f32 %v153, %v45
    %v156 = vadd.f32 %v155, %v52
    %158 = vrot.lane.b32.xlu0 %v150, 32
    %v159 = vpop.permute.xlu0 %158
    %v160 = vsel %vm55, %v159, 0
    %162 = vmatprep.subr.mxu0 0.0
    %163 = vmatpush1.msra.mxu0 0.0
    %164 = vmatprep.subr.mxu0 0.0
    %165 = vmatpush1.msra.mxu0 0.0
    %166 = vmatprep.subr.mxu0 0.0
    %167 = vmatpush1.msra.mxu0 0.0
    %168 = vmatprep.subr.mxu0 0.0
    %169 = vmatpush1.msra.mxu0 0.0
    %170 = vmatprep.subr.mxu0 0.0
    %171 = vmatpush1.msra.mxu0 0.0
    %172 = vmatprep.subr.mxu0 0.0
    %173 = vmatpush1.msra.mxu0 0.0
    %174 = vmatprep.subr.mxu0 0.0
    %175 = vmatpush1.msra.mxu0 0.0
    %176 = vmatprep.subr.mxu0 0.0
    %177 = vmatpush1.msra.mxu0 0.0
    %178 = vmatprep.subr.mxu0 0.0
    %179 = vmatpush1.msra.mxu0 0.0
    %180 = vmatprep.subr.mxu0 0.0
    %181 = vmatpush1.msra.mxu0 0.0
    %182 = vmatprep.subr.mxu0 0.0
    %183 = vmatpush1.msra.mxu0 0.0
    %184 = vmatprep.subr.mxu0 0.0
    %185 = vmatpush1.msra.mxu0 0.0
    %186 = vmatprep.subr.mxu0 0.0
    %187 = vmatpush1.msra.mxu0 %v28
    %188 = vmatprep.subr.mxu0 0.0
    %189 = vmatpush1.msra.mxu0 %v27
    %190 = vmatprep.subr.mxu0 0.0
    %191 = vmatpush1.msra.mxu0 %v26
    %192 = vmatprep.subr.mxu0 0.0
    %193 = vmatpush1.msra.mxu0 %v25
    %194 = vmatprep.subr.mxu0 0.0
    %195 = vmatpush2.msra.mxu0 0.0
    %196 = vmatprep.subr.mxu0 0.0
    %197 = vmatpush2.msra.mxu0 0.0
    %198 = vmatprep.subr.mxu0 0.0
    %199 = vmatpush2.msra.mxu0 0.0
    %200 = vmatprep.subr.mxu0 0.0
    %201 = vmatpush2.msra.mxu0 0.0
    %202 = vmatprep.subr.mxu0 0.0
    %203 = vmatpush2.msra.mxu0 0.0
    %204 = vmatprep.subr.mxu0 0.0
    %205 = vmatpush2.msra.mxu0 0.0
    %206 = vmatprep.subr.mxu0 0.0
    %207 = vmatpush2.msra.mxu0 0.0
    %208 = vmatprep.subr.mxu0 0.0
    %209 = vmatpush2.msra.mxu0 0.0
    %210 = vmatprep.subr.mxu0 0.0
    %211 = vmatpush2.msra.mxu0 0.0
    %212 = vmatprep.subr.mxu0 0.0
    %213 = vmatpush2.msra.mxu0 0.0
    %214 = vmatprep.subr.mxu0 0.0
    %215 = vmatpush2.msra.mxu0 0.0
    %216 = vmatprep.subr.mxu0 0.0
    %217 = vmatpush2.msra.mxu0 0.0
    %218 = vmatprep.subr.mxu0 0.0
    %219 = vmatpush2.msra.mxu0 0.0
    %220 = vmatprep.subr.mxu0 0.0
    %221 = vmatpush2.msra.mxu0 0.0
    %222 = vmatprep.subr.mxu0 0.0
    %223 = vmatpush2.msra.mxu0 0.0
    %224 = vmatprep.subr.mxu0 0.0
    %225 = vmatpush2.msra.mxu0 0.0
    %226 = vmatprep.mubr.f32.mxu0 0.0
    %227 = vmatmul.mubr.f32.gmra.mxu0 %v160
    %v228 = vpop.f32.mrf.mxu0
    %v229 = vadd.f32 %v156, %v228
    %v230 = vpop.f32.mrf.mxu0
    %231 = vdwg.mxu0
    %v232 = vmul.f32 %v229, 0.5
    %v233 = vtanh.pop %v232
    %v234 = vadd.f32 %v233, 1.0
    %v235 = vmul.f32 %v234, 0.5
    %v236 = vtanh.pop %v229
    %v237 = vmul.f32 %v235, %v144
    %239 = vrot.lane.b32.xlu0 %v236, 64
    %v240 = vpop.permute.xlu0 %239
    %v242 = vmul.f32 %v235, %v240
    %244 = vrot.lane.b32.xlu0 %v242, 32
    %v245 = vpop.permute.xlu0 %244
    %v247 = vadd.f32 %v237, %v245
    %v248 = vtanh.pop %v247
    %250 = vrot.lane.b32.xlu0 %v248, 64
    %v251 = vpop.permute.xlu0 %250
    %v253 = vmul.f32 %v235, %v251
    %254 = vset.pattern.permute.xlu0 2
    %255 = vperm.xlu0 %254, %v35
    %v256 = vpop.permute.xlu0 %255
    %v258 = vmul.f32 %v256, %v45
    %v259 = vadd.f32 %v258, %v52
    %261 = vrot.lane.b32.xlu0 %v253, 32
    %v262 = vpop.permute.xlu0 %261
    %v263 = vsel %vm55, %v262, 0
    %265 = vmatprep.subr.mxu0 0.0
    %266 = vmatpush1.msra.mxu0 0.0
    %267 = vmatprep.subr.mxu0 0.0
    %268 = vmatpush1.msra.mxu0 0.0
    %269 = vmatprep.subr.mxu0 0.0
    %270 = vmatpush1.msra.mxu0 0.0
    %271 = vmatprep.subr.mxu0 0.0
    %272 = vmatpush1.msra.mxu0 0.0
    %273 = vmatprep.subr.mxu0 0.0
    %274 = vmatpush1.msra.mxu0 0.0
    %275 = vmatprep.subr.mxu0 0.0
    %276 = vmatpush1.msra.mxu0 0.0
    %277 = vmatprep.subr.mxu0 0.0
    %278 = vmatpush1.msra.mxu0 0.0
    %279 = vmatprep.subr.mxu0 0.0
    %280 = vmatpush1.msra.mxu0 0.0
    %281 = vmatprep.subr.mxu0 0.0
    %282 = vmatpush1.msra.mxu0 0.0
    %283 = vmatprep.subr.mxu0 0.0
    %284 = vmatpush1.msra.mxu0 0.0
    %285 = vmatprep.subr.mxu0 0.0
    %286 = vmatpush1.msra.mxu0 0.0
    %287 = vmatprep.subr.mxu0 0.0
    %288 = vmatpush1.msra.mxu0 0.0
    %289 = vmatprep.subr.mxu0 0.0
    %290 = vmatpush1.msra.mxu0 %v28
    %291 = vmatprep.subr.mxu0 0.0
    %292 = vmatpush1.msra.mxu0 %v27
    %293 = vmatprep.subr.mxu0 0.0
    %294 = vmatpush1.msra.mxu0 %v26
    %295 = vmatprep.subr.mxu0 0.0
    %296 = vmatpush1.msra.mxu0 %v25
    %297 = vmatprep.subr.mxu0 0.0
    %298 = vmatpush2.msra.mxu0 0.0
    %299 = vmatprep.subr.mxu0 0.0
    %300 = vmatpush2.msra.mxu0 0.0
    %301 = vmatprep.subr.mxu0 0.0
    %302 = vmatpush2.msra.mxu0 0.0
    %303 = vmatprep.subr.mxu0 0.0
    %304 = vmatpush2.msra.mxu0 0.0
    %305 = vmatprep.subr.mxu0 0.0
    %306 = vmatpush2.msra.mxu0 0.0
    %307 = vmatprep.subr.mxu0 0.0
    %308 = vmatpush2.msra.mxu0 0.0
    %309 = vmatprep.subr.mxu0 0.0
    %310 = vmatpush2.msra.mxu0 0.0
    %311 = vmatprep.subr.mxu0 0.0
    %312 = vmatpush2.msra.mxu0 0.0
    %313 = vmatprep.subr.mxu0 0.0
    %314 = vmatpush2.msra.mxu0 0.0
    %315 = vmatprep.subr.mxu0 0.0
    %316 = vmatpush2.msra.mxu0 0.0
    %317 = vmatprep.subr.mxu0 0.0
    %318 = vmatpush2.msra.mxu0 0.0
    %319 = vmatprep.subr.mxu0 0.0
    %320 = vmatpush2.msra.mxu0 0.0
    %321 = vmatprep.subr.mxu0 0.0
    %322 = vmatpush2.msra.mxu0 0.0
    %323 = vmatprep.subr.mxu0 0.0
    %324 = vmatpush2.msra.mxu0 0.0
    %325 = vmatprep.subr.mxu0 0.0
    %326 = vmatpush2.msra.mxu0 0.0
    %327 = vmatprep.subr.mxu0 0.0
    %328 = vmatpush2.msra.mxu0 0.0
    %329 = vmatprep.mubr.f32.mxu0 0.0
    %330 = vmatmul.mubr.f32.gmra.mxu0 %v263
    %v331 = vpop.f32.mrf.mxu0
    %v332 = vadd.f32 %v259, %v331
    %v333 = vpop.f32.mrf.mxu0
    %334 = vdwg.mxu0
    %v335 = vmul.f32 %v332, 0.5
    %v336 = vtanh.pop %v335
    %v337 = vadd.f32 %v336, 1.0
    %v338 = vmul.f32 %v337, 0.5
    %v339 = vtanh.pop %v332
    %v340 = vmul.f32 %v338, %v247
    %342 = vrot.lane.b32.xlu0 %v339, 64
    %v343 = vpop.permute.xlu0 %342
    %v345 = vmul.f32 %v338, %v343
    %347 = vrot.lane.b32.xlu0 %v345, 32
    %v348 = vpop.permute.xlu0 %347
    %v350 = vadd.f32 %v340, %v348
    %v351 = vtanh.pop %v350
    %353 = vrot.lane.b32.xlu0 %v351, 64
    %v354 = vpop.permute.xlu0 %353
    %v356 = vmul.f32 %v338, %v354
    %357 = vset.pattern.permute.xlu0 3
    %358 = vperm.xlu0 %357, %v35
    %v359 = vpop.permute.xlu0 %358
    %v361 = vmul.f32 %v359, %v45
    %v362 = vadd.f32 %v361, %v52
    %364 = vrot.lane.b32.xlu0 %v356, 32
    %v365 = vpop.permute.xlu0 %364
    %v366 = vsel %vm55, %v365, 0
    %368 = vmatprep.subr.mxu0 0.0
    %369 = vmatpush1.msra.mxu0 0.0
    %370 = vmatprep.subr.mxu0 0.0
    %371 = vmatpush1.msra.mxu0 0.0
    %372 = vmatprep.subr.mxu0 0.0
    %373 = vmatpush1.msra.mxu0 0.0
    %374 = vmatprep.subr.mxu0 0.0
    %375 = vmatpush1.msra.mxu0 0.0
    %376 = vmatprep.subr.mxu0 0.0
    %377 = vmatpush1.msra.mxu0 0.0
    %378 = vmatprep.subr.mxu0 0.0
    %379 = vmatpush1.msra.mxu0 0.0
    %380 = vmatprep.subr.mxu0 0.0
    %381 = vmatpush1.msra.mxu0 0.0
    %382 = vmatprep.subr.mxu0 0.0
    %383 = vmatpush1.msra.mxu0 0.0
    %384 = vmatprep.subr.mxu0 0.0
    %385 = vmatpush1.msra.mxu0 0.0
    %386 = vmatprep.subr.mxu0 0.0
    %387 = vmatpush1.msra.mxu0 0.0
    %388 = vmatprep.subr.mxu0 0.0
    %389 = vmatpush1.msra.mxu0 0.0
    %390 = vmatprep.subr.mxu0 0.0
    %391 = vmatpush1.msra.mxu0 0.0
    %392 = vmatprep.subr.mxu0 0.0
    %393 = vmatpush1.msra.mxu0 %v28
    %394 = vmatprep.subr.mxu0 0.0
    %395 = vmatpush1.msra.mxu0 %v27
    %396 = vmatprep.subr.mxu0 0.0
    %397 = vmatpush1.msra.mxu0 %v26
    %398 = vmatprep.subr.mxu0 0.0
    %399 = vmatpush1.msra.mxu0 %v25
    %400 = vmatprep.subr.mxu0 0.0
    %401 = vmatpush2.msra.mxu0 0.0
    %402 = vmatprep.subr.mxu0 0.0
    %403 = vmatpush2.msra.mxu0 0.0
    %404 = vmatprep.subr.mxu0 0.0
    %405 = vmatpush2.msra.mxu0 0.0
    %406 = vmatprep.subr.mxu0 0.0
    %407 = vmatpush2.msra.mxu0 0.0
    %408 = vmatprep.subr.mxu0 0.0
    %409 = vmatpush2.msra.mxu0 0.0
    %410 = vmatprep.subr.mxu0 0.0
    %411 = vmatpush2.msra.mxu0 0.0
    %412 = vmatprep.subr.mxu0 0.0
    %413 = vmatpush2.msra.mxu0 0.0
    %414 = vmatprep.subr.mxu0 0.0
    %415 = vmatpush2.msra.mxu0 0.0
    %416 = vmatprep.subr.mxu0 0.0
    %417 = vmatpush2.msra.mxu0 0.0
    %418 = vmatprep.subr.mxu0 0.0
    %419 = vmatpush2.msra.mxu0 0.0
    %420 = vmatprep.subr.mxu0 0.0
    %421 = vmatpush2.msra.mxu0 0.0
    %422 = vmatprep.subr.mxu0 0.0
    %423 = vmatpush2.msra.mxu0 0.0
    %424 = vmatprep.subr.mxu0 0.0
    %425 = vmatpush2.msra.mxu0 0.0
    %426 = vmatprep.subr.mxu0 0.0
    %427 = vmatpush2.msra.mxu0 0.0
    %428 = vmatprep.subr.mxu0 0.0
    %429 = vmatpush2.msra.mxu0 0.0
    %430 = vmatprep.subr.mxu0 0.0
    %431 = vmatpush2.msra.mxu0 0.0
    %432 = vmatprep.mubr.f32.mxu0 0.0
    %433 = vmatmul.mubr.f32.gmra.mxu0 %v366
    %v434 = vpop.f32.mrf.mxu0
    %v435 = vadd.f32 %v362, %v434
    %v436 = vpop.f32.mrf.mxu0
    %437 = vdwg.mxu0
    %v438 = vmul.f32 %v435, 0.5
    %v439 = vtanh.pop %v438
    %v440 = vadd.f32 %v439, 1.0
    %v441 = vmul.f32 %v440, 0.5
    %v442 = vtanh.pop %v435
    %v443 = vmul.f32 %v441, %v350
    %445 = vrot.lane.b32.xlu0 %v442, 64
    %v446 = vpop.permute.xlu0 %445
    %v448 = vmul.f32 %v441, %v446
    %450 = vrot.lane.b32.xlu0 %v448, 32
    %v451 = vpop.permute.xlu0 %450
    %v453 = vadd.f32 %v443, %v451
    %v454 = vtanh.pop %v453
    %456 = vrot.lane.b32.xlu0 %v454, 64
    %v457 = vpop.permute.xlu0 %456
    %v459 = vmul.f32 %v441, %v457
    %460 = vset.pattern.permute.xlu0 4
    %461 = vperm.xlu0 %460, %v35
    %v462 = vpop.permute.xlu0 %461
    %v464 = vmul.f32 %v462, %v45
    %v465 = vadd.f32 %v464, %v52
    %467 = vrot.lane.b32.xlu0 %v459, 32
    %v468 = vpop.permute.xlu0 %467
    %v469 = vsel %vm55, %v468, 0
    %471 = vmatprep.subr.mxu0 0.0
    %472 = vmatpush1.msra.mxu0 0.0
    %473 = vmatprep.subr.mxu0 0.0
    %474 = vmatpush1.msra.mxu0 0.0
    %475 = vmatprep.subr.mxu0 0.0
    %476 = vmatpush1.msra.mxu0 0.0
    %477 = vmatprep.subr.mxu0 0.0
    %478 = vmatpush1.msra.mxu0 0.0
    %479 = vmatprep.subr.mxu0 0.0
    %480 = vmatpush1.msra.mxu0 0.0
    %481 = vmatprep.subr.mxu0 0.0
    %482 = vmatpush1.msra.mxu0 0.0
    %483 = vmatprep.subr.mxu0 0.0
    %484 = vmatpush1.msra.mxu0 0.0
    %485 = vmatprep.subr.mxu0 0.0
    %486 = vmatpush1.msra.mxu0 0.0
    %487 = vmatprep.subr.mxu0 0.0
    %488 = vmatpush1.msra.mxu0 0.0
    %489 = vmatprep.subr.mxu0 0.0
    %490 = vmatpush1.msra.mxu0 0.0
    %491 = vmatprep.subr.mxu0 0.0
    %492 = vmatpush1.msra.mxu0 0.0
    %493 = vmatprep.subr.mxu0 0.0
    %494 = vmatpush1.msra.mxu0 0.0
    %495 = vmatprep.subr.mxu0 0.0
    %496 = vmatpush1.msra.mxu0 %v28
    %497 = vmatprep.subr.mxu0 0.0
    %498 = vmatpush1.msra.mxu0 %v27
    %499 = vmatprep.subr.mxu0 0.0
    %500 = vmatpush1.msra.mxu0 %v26
    %501 = vmatprep.subr.mxu0 0.0
    %502 = vmatpush1.msra.mxu0 %v25
    %503 = vmatprep.subr.mxu0 0.0
    %504 = vmatpush2.msra.mxu0 0.0
    %505 = vmatprep.subr.mxu0 0.0
    %506 = vmatpush2.msra.mxu0 0.0
    %507 = vmatprep.subr.mxu0 0.0
    %508 = vmatpush2.msra.mxu0 0.0
    %509 = vmatprep.subr.mxu0 0.0
    %510 = vmatpush2.msra.mxu0 0.0
    %511 = vmatprep.subr.mxu0 0.0
    %512 = vmatpush2.msra.mxu0 0.0
    %513 = vmatprep.subr.mxu0 0.0
    %514 = vmatpush2.msra.mxu0 0.0
    %515 = vmatprep.subr.mxu0 0.0
    %516 = vmatpush2.msra.mxu0 0.0
    %517 = vmatprep.subr.mxu0 0.0
    %518 = vmatpush2.msra.mxu0 0.0
    %519 = vmatprep.subr.mxu0 0.0
    %520 = vmatpush2.msra.mxu0 0.0
    %521 = vmatprep.subr.mxu0 0.0
    %522 = vmatpush2.msra.mxu0 0.0
    %523 = vmatprep.subr.mxu0 0.0
    %524 = vmatpush2.msra.mxu0 0.0
    %525 = vmatprep.subr.mxu0 0.0
    %526 = vmatpush2.msra.mxu0 0.0
    %527 = vmatprep.subr.mxu0 0.0
    %528 = vmatpush2.msra.mxu0 0.0
    %529 = vmatprep.subr.mxu0 0.0
    %530 = vmatpush2.msra.mxu0 0.0
    %531 = vmatprep.subr.mxu0 0.0
    %532 = vmatpush2.msra.mxu0 0.0
    %533 = vmatprep.subr.mxu0 0.0
    %534 = vmatpush2.msra.mxu0 0.0
    %535 = vmatprep.mubr.f32.mxu0 0.0
    %536 = vmatmul.mubr.f32.gmra.mxu0 %v469
    %v537 = vpop.f32.mrf.mxu0
    %v538 = vadd.f32 %v465, %v537
    %v539 = vpop.f32.mrf.mxu0
    %540 = vdwg.mxu0
    %v541 = vmul.f32 %v538, 0.5
    %v542 = vtanh.pop %v541
    %v543 = vadd.f32 %v542, 1.0
    %v544 = vmul.f32 %v543, 0.5
    %v545 = vtanh.pop %v538
    %v546 = vmul.f32 %v544, %v453
    %548 = vrot.lane.b32.xlu0 %v545, 64
    %v549 = vpop.permute.xlu0 %548
    %v551 = vmul.f32 %v544, %v549
    %553 = vrot.lane.b32.xlu0 %v551, 32
    %v554 = vpop.permute.xlu0 %553
    %v556 = vadd.f32 %v546, %v554
    %v557 = vtanh.pop %v556
    %559 = vrot.lane.b32.xlu0 %v557, 64
    %v560 = vpop.permute.xlu0 %559
    %v562 = vmul.f32 %v544, %v560
    %563 = vset.pattern.permute.xlu0 5
    %564 = vperm.xlu0 %563, %v35
    %v565 = vpop.permute.xlu0 %564
    %v567 = vmul.f32 %v565, %v45
    %v568 = vadd.f32 %v567, %v52
    %570 = vrot.lane.b32.xlu0 %v562, 32
    %v571 = vpop.permute.xlu0 %570
    %v572 = vsel %vm55, %v571, 0
    %574 = vmatprep.subr.mxu0 0.0
    %575 = vmatpush1.msra.mxu0 0.0
    %576 = vmatprep.subr.mxu0 0.0
    %577 = vmatpush1.msra.mxu0 0.0
    %578 = vmatprep.subr.mxu0 0.0
    %579 = vmatpush1.msra.mxu0 0.0
    %580 = vmatprep.subr.mxu0 0.0
    %581 = vmatpush1.msra.mxu0 0.0
    %582 = vmatprep.subr.mxu0 0.0
    %583 = vmatpush1.msra.mxu0 0.0
    %584 = vmatprep.subr.mxu0 0.0
    %585 = vmatpush1.msra.mxu0 0.0
    %586 = vmatprep.subr.mxu0 0.0
    %587 = vmatpush1.msra.mxu0 0.0
    %588 = vmatprep.subr.mxu0 0.0
    %589 = vmatpush1.msra.mxu0 0.0
    %590 = vmatprep.subr.mxu0 0.0
    %591 = vmatpush1.msra.mxu0 0.0
    %592 = vmatprep.subr.mxu0 0.0
    %593 = vmatpush1.msra.mxu0 0.0
    %594 = vmatprep.subr.mxu0 0.0
    %595 = vmatpush1.msra.mxu0 0.0
    %596 = vmatprep.subr.mxu0 0.0
    %597 = vmatpush1.msra.mxu0 0.0
    %598 = vmatprep.subr.mxu0 0.0
    %599 = vmatpush1.msra.mxu0 %v28
    %600 = vmatprep.subr.mxu0 0.0
    %601 = vmatpush1.msra.mxu0 %v27
    %602 = vmatprep.subr.mxu0 0.0
    %603 = vmatpush1.msra.mxu0 %v26
    %604 = vmatprep.subr.mxu0 0.0
    %605 = vmatpush1.msra.mxu0 %v25
    %606 = vmatprep.subr.mxu0 0.0
    %607 = vmatpush2.msra.mxu0 0.0
    %608 = vmatprep.subr.mxu0 0.0
    %609 = vmatpush2.msra.mxu0 0.0
    %610 = vmatprep.subr.mxu0 0.0
    %611 = vmatpush2.msra.mxu0 0.0
    %612 = vmatprep.subr.mxu0 0.0
    %613 = vmatpush2.msra.mxu0 0.0
    %614 = vmatprep.subr.mxu0 0.0
    %615 = vmatpush2.msra.mxu0 0.0
    %616 = vmatprep.subr.mxu0 0.0
    %617 = vmatpush2.msra.mxu0 0.0
    %618 = vmatprep.subr.mxu0 0.0
    %619 = vmatpush2.msra.mxu0 0.0
    %620 = vmatprep.subr.mxu0 0.0
    %621 = vmatpush2.msra.mxu0 0.0
    %622 = vmatprep.subr.mxu0 0.0
    %623 = vmatpush2.msra.mxu0 0.0
    %624 = vmatprep.subr.mxu0 0.0
    %625 = vmatpush2.msra.mxu0 0.0
    %626 = vmatprep.subr.mxu0 0.0
    %627 = vmatpush2.msra.mxu0 0.0
    %628 = vmatprep.subr.mxu0 0.0
    %629 = vmatpush2.msra.mxu0 0.0
    %630 = vmatprep.subr.mxu0 0.0
    %631 = vmatpush2.msra.mxu0 0.0
    %632 = vmatprep.subr.mxu0 0.0
    %633 = vmatpush2.msra.mxu0 0.0
    %634 = vmatprep.subr.mxu0 0.0
    %635 = vmatpush2.msra.mxu0 0.0
    %636 = vmatprep.subr.mxu0 0.0
    %637 = vmatpush2.msra.mxu0 0.0
    %638 = vmatprep.mubr.f32.mxu0 0.0
    %639 = vmatmul.mubr.f32.gmra.mxu0 %v572
    %v640 = vpop.f32.mrf.mxu0
    %v641 = vadd.f32 %v568, %v640
    %v642 = vpop.f32.mrf.mxu0
    %643 = vdwg.mxu0
    %v644 = vmul.f32 %v641, 0.5
    %v645 = vtanh.pop %v644
    %v646 = vadd.f32 %v645, 1.0
    %v647 = vmul.f32 %v646, 0.5
    %v648 = vtanh.pop %v641
    %v649 = vmul.f32 %v647, %v556
    %651 = vrot.lane.b32.xlu0 %v648, 64
    %v652 = vpop.permute.xlu0 %651
    %v654 = vmul.f32 %v647, %v652
    %656 = vrot.lane.b32.xlu0 %v654, 32
    %v657 = vpop.permute.xlu0 %656
    %v659 = vadd.f32 %v649, %v657
    %v660 = vtanh.pop %v659
    %662 = vrot.lane.b32.xlu0 %v660, 64
    %v663 = vpop.permute.xlu0 %662
    %v665 = vmul.f32 %v647, %v663
    %666 = vset.pattern.permute.xlu0 6
    %667 = vperm.xlu0 %666, %v35
    %v668 = vpop.permute.xlu0 %667
    %v670 = vmul.f32 %v668, %v45
    %v671 = vadd.f32 %v670, %v52
    %673 = vrot.lane.b32.xlu0 %v665, 32
    %v674 = vpop.permute.xlu0 %673
    %v675 = vsel %vm55, %v674, 0
    %677 = vmatprep.subr.mxu0 0.0
    %678 = vmatpush1.msra.mxu0 0.0
    %679 = vmatprep.subr.mxu0 0.0
    %680 = vmatpush1.msra.mxu0 0.0
    %681 = vmatprep.subr.mxu0 0.0
    %682 = vmatpush1.msra.mxu0 0.0
    %683 = vmatprep.subr.mxu0 0.0
    %684 = vmatpush1.msra.mxu0 0.0
    %685 = vmatprep.subr.mxu0 0.0
    %686 = vmatpush1.msra.mxu0 0.0
    %687 = vmatprep.subr.mxu0 0.0
    %688 = vmatpush1.msra.mxu0 0.0
    %689 = vmatprep.subr.mxu0 0.0
    %690 = vmatpush1.msra.mxu0 0.0
    %691 = vmatprep.subr.mxu0 0.0
    %692 = vmatpush1.msra.mxu0 0.0
    %693 = vmatprep.subr.mxu0 0.0
    %694 = vmatpush1.msra.mxu0 0.0
    %695 = vmatprep.subr.mxu0 0.0
    %696 = vmatpush1.msra.mxu0 0.0
    %697 = vmatprep.subr.mxu0 0.0
    %698 = vmatpush1.msra.mxu0 0.0
    %699 = vmatprep.subr.mxu0 0.0
    %700 = vmatpush1.msra.mxu0 0.0
    %701 = vmatprep.subr.mxu0 0.0
    %702 = vmatpush1.msra.mxu0 %v28
    %703 = vmatprep.subr.mxu0 0.0
    %704 = vmatpush1.msra.mxu0 %v27
    %705 = vmatprep.subr.mxu0 0.0
    %706 = vmatpush1.msra.mxu0 %v26
    %707 = vmatprep.subr.mxu0 0.0
    %708 = vmatpush1.msra.mxu0 %v25
    %709 = vmatprep.subr.mxu0 0.0
    %710 = vmatpush2.msra.mxu0 0.0
    %711 = vmatprep.subr.mxu0 0.0
    %712 = vmatpush2.msra.mxu0 0.0
    %713 = vmatprep.subr.mxu0 0.0
    %714 = vmatpush2.msra.mxu0 0.0
    %715 = vmatprep.subr.mxu0 0.0
    %716 = vmatpush2.msra.mxu0 0.0
    %717 = vmatprep.subr.mxu0 0.0
    %718 = vmatpush2.msra.mxu0 0.0
    %719 = vmatprep.subr.mxu0 0.0
    %720 = vmatpush2.msra.mxu0 0.0
    %721 = vmatprep.subr.mxu0 0.0
    %722 = vmatpush2.msra.mxu0 0.0
    %723 = vmatprep.subr.mxu0 0.0
    %724 = vmatpush2.msra.mxu0 0.0
    %725 = vmatprep.subr.mxu0 0.0
    %726 = vmatpush2.msra.mxu0 0.0
    %727 = vmatprep.subr.mxu0 0.0
    %728 = vmatpush2.msra.mxu0 0.0
    %729 = vmatprep.subr.mxu0 0.0
    %730 = vmatpush2.msra.mxu0 0.0
    %731 = vmatprep.subr.mxu0 0.0
    %732 = vmatpush2.msra.mxu0 0.0
    %733 = vmatprep.subr.mxu0 0.0
    %734 = vmatpush2.msra.mxu0 0.0
    %735 = vmatprep.subr.mxu0 0.0
    %736 = vmatpush2.msra.mxu0 0.0
    %737 = vmatprep.subr.mxu0 0.0
    %738 = vmatpush2.msra.mxu0 0.0
    %739 = vmatprep.subr.mxu0 0.0
    %740 = vmatpush2.msra.mxu0 0.0
    %741 = vmatprep.mubr.f32.mxu0 0.0
    %742 = vmatmul.mubr.f32.gmra.mxu0 %v675
    %v743 = vpop.f32.mrf.mxu0
    %v744 = vadd.f32 %v671, %v743
    %v745 = vpop.f32.mrf.mxu0
    %746 = vdwg.mxu0
    %v747 = vmul.f32 %v744, 0.5
    %v748 = vtanh.pop %v747
    %v749 = vadd.f32 %v748, 1.0
    %v750 = vmul.f32 %v749, 0.5
    %v751 = vtanh.pop %v744
    %v752 = vmul.f32 %v750, %v659
    %754 = vrot.lane.b32.xlu0 %v751, 64
    %v755 = vpop.permute.xlu0 %754
    %v757 = vmul.f32 %v750, %v755
    %759 = vrot.lane.b32.xlu0 %v757, 32
    %v760 = vpop.permute.xlu0 %759
    %v762 = vadd.f32 %v752, %v760
    %v763 = vtanh.pop %v762
    %765 = vrot.lane.b32.xlu0 %v763, 64
    %v766 = vpop.permute.xlu0 %765
    %v768 = vmul.f32 %v750, %v766
    %v770 = vlaneseq
    %v771 = vshrl.u32 %v770, 7
    %v772 = vsub.s32 0, %v771
    %v773 = vrot.slane %v34, %v772
    %776 = vrot.lane.b32.xlu0 %v768, 32
    %v777 = vpop.permute.xlu0 %776
    %v778 = vsel %vm55, %v777, 0
    %780 = vmatprep.subr.mxu0 0.0
    %781 = vmatpush1.msra.mxu0 0.0
    %782 = vmatprep.subr.mxu0 0.0
    %783 = vmatpush1.msra.mxu0 0.0
    %784 = vmatprep.subr.mxu0 0.0
    %785 = vmatpush1.msra.mxu0 0.0
    %786 = vmatprep.subr.mxu0 0.0
    %787 = vmatpush1.msra.mxu0 0.0
    %788 = vmatprep.subr.mxu0 0.0
    %789 = vmatpush1.msra.mxu0 0.0
    %790 = vmatprep.subr.mxu0 0.0
    %791 = vmatpush1.msra.mxu0 0.0
    %792 = vmatprep.subr.mxu0 0.0
    %793 = vmatpush1.msra.mxu0 0.0
    %794 = vmatprep.subr.mxu0 0.0
    %795 = vmatpush1.msra.mxu0 0.0
    %796 = vmatprep.subr.mxu0 0.0
    %797 = vmatpush1.msra.mxu0 0.0
    %798 = vmatprep.subr.mxu0 0.0
    %799 = vmatpush1.msra.mxu0 0.0
    %800 = vmatprep.subr.mxu0 0.0
    %801 = vmatpush1.msra.mxu0 0.0
    %802 = vmatprep.subr.mxu0 0.0
    %803 = vmatpush1.msra.mxu0 0.0
    %804 = vmatprep.subr.mxu0 0.0
    %805 = vmatpush1.msra.mxu0 %v33
    %806 = vmatprep.subr.mxu0 0.0
    %807 = vmatpush1.msra.mxu0 %v32
    %808 = vmatprep.subr.mxu0 0.0
    %809 = vmatpush1.msra.mxu0 %v31
    %810 = vmatprep.subr.mxu0 0.0
    %811 = vmatpush1.msra.mxu0 %v30
    %812 = vmatprep.subr.mxu0 0.0
    %813 = vmatpush2.msra.mxu0 0.0
    %814 = vmatprep.subr.mxu0 0.0
    %815 = vmatpush2.msra.mxu0 0.0
    %816 = vmatprep.subr.mxu0 0.0
    %817 = vmatpush2.msra.mxu0 0.0
    %818 = vmatprep.subr.mxu0 0.0
    %819 = vmatpush2.msra.mxu0 0.0
    %820 = vmatprep.subr.mxu0 0.0
    %821 = vmatpush2.msra.mxu0 0.0
    %822 = vmatprep.subr.mxu0 0.0
    %823 = vmatpush2.msra.mxu0 0.0
    %824 = vmatprep.subr.mxu0 0.0
    %825 = vmatpush2.msra.mxu0 0.0
    %826 = vmatprep.subr.mxu0 0.0
    %827 = vmatpush2.msra.mxu0 0.0
    %828 = vmatprep.subr.mxu0 0.0
    %829 = vmatpush2.msra.mxu0 0.0
    %830 = vmatprep.subr.mxu0 0.0
    %831 = vmatpush2.msra.mxu0 0.0
    %832 = vmatprep.subr.mxu0 0.0
    %833 = vmatpush2.msra.mxu0 0.0
    %834 = vmatprep.subr.mxu0 0.0
    %835 = vmatpush2.msra.mxu0 0.0
    %836 = vmatprep.subr.mxu0 0.0
    %837 = vmatpush2.msra.mxu0 0.0
    %838 = vmatprep.subr.mxu0 0.0
    %839 = vmatpush2.msra.mxu0 0.0
    %840 = vmatprep.subr.mxu0 0.0
    %841 = vmatpush2.msra.mxu0 0.0
    %842 = vmatprep.subr.mxu0 0.0
    %843 = vmatpush2.msra.mxu0 0.0
    %844 = vmatprep.mubr.f32.mxu0 0.0
    %845 = vmatmul.mubr.f32.gmra.mxu0 %v778
    %v846 = vpop.f32.mrf.mxu0
    %v847 = vadd.f32 %v773, %v846
    %v848 = vpop.f32.mrf.mxu0
    %849 = vdwg.mxu0
    %vm850 = vcmask 64512
    %v851 = vsel %vm850, %v847, -inf
    %852 = vmax.xlane.f32.xlu0 %v851
    %v853 = vpop.xlane.xlu0 %852
    %v854 = vsub.f32 %v847, %v853
    %v855 = vmul.f32 %v854, 1.442695
    %v856 = vpow.pop %v855
    %v857 = vsel %vm850, %v856, 0.0
    %858 = vadd.xlane.f32.xlu0 %v857
    %v859 = vpop.xlane.xlu0 %858
    %v860 = vlog2.pop %v859
    %v861 = vmul.f32 %v860, 0.6931472
    %v862 = vsub.f32 %v854, %v861
    %863 = vst.msk [vmem:[#allocation2] sm:$0xff] %vm850, %v862
    // Predicated region
    $region26: #{tpu_custom_call.1} parent=1 // pred_check
      _
    $region27: #{tpu_custom_call.1} parent=1 // pred_check_branch
      %865 = sbr.rel (0) target = $region29
    $region28: #{tpu_custom_call.1} parent=1 // pred_region
      %s867 = ssub.s32 128, 128
      %868 = vsyncadd [#allocation3], %s867
      %s870 = sshll.u32 [#allocation2], 4
      %s871 = int_to_ptr.vmem [resolvable:$true] %s870
      %873 = dma.vmem_to_hbm [thread:$0]  %s871, 128, %s6, [#allocation3]
    $region29: #{tpu_custom_call.1} parent=1 // pred_fallthru
      _
    // Predicated region
    $region30: #{tpu_custom_call.1} parent=1 // pred_check
      _
    $region31: #{tpu_custom_call.1} parent=1 // pred_check_branch
      %875 = sbr.rel (0) target = $region33
    $region32: #{tpu_custom_call.1} parent=1 // pred_region
      %876 = dma.done [#allocation3], 128
    $region33: #{tpu_custom_call.1} parent=1 // pred_fallthru
      _
    %877 = vsyncpa [#allocation3], 1

</llo_original>
